<compile_context>
chip_gen: v6e
topology: v6e:2x2x1
jax: 0.10.0
libtpu: 0.0.40
codegen_flags: <defaults>
</compile_context>

<pallas_src>
import functools
import math

import jax
import jax.numpy as jnp
from jax.experimental import pallas as pl
from jax.experimental.pallas import tpu as pltpu


# ----------------------------- small helpers (used inside kernels) -----------------------------

def _layer_norm(x, g, b, eps=1e-5):
    mu = jnp.mean(x, axis=-1, keepdims=True)
    var = jnp.mean(jnp.square(x - mu), axis=-1, keepdims=True)
    return (x - mu) * jax.lax.rsqrt(var + eps) * g + b


def _silu(x):
    return x * jax.nn.sigmoid(x)


# ----------------------------- subsampling projection (tiled linear) ---------------------------

def _linear_kernel(x_ref, w_ref, b_ref, o_ref):
    o_ref[...] = (jnp.dot(x_ref[...], w_ref[...], preferred_element_type=jnp.float32)
                  + b_ref[...]).astype(o_ref.dtype)


def linear(x, w, b, *, tile_m=256):
    # x: (M, K), w: (K, N), b: (1, N) -- tiled over M so big B*T doesn't blow scoped VMEM.
    M, K = x.shape
    N = w.shape[1]
    tm = M if M <= tile_m else tile_m
    return pl.pallas_call(
        _linear_kernel,
        out_shape=jax.ShapeDtypeStruct((M, N), x.dtype),
        grid=(pl.cdiv(M, tm),),
        in_specs=[pl.BlockSpec((tm, K), lambda i: (i, 0)),
                  pl.BlockSpec((K, N), lambda i: (0, 0)),
                  pl.BlockSpec((1, N), lambda i: (0, 0))],
        out_specs=pl.BlockSpec((tm, N), lambda i: (i, 0)),
        compiler_params=pltpu.CompilerParams(dimension_semantics=("parallel",)),
    )(x, w, b)


# ----------------------------- packed small-vector layout --------------------------------------

VEC_D_NAMES = (
    "ffn1_ln_g", "ffn1_ln_b", "ffn1_b2",
    "attn_ln_g", "attn_ln_b", "bo",
    "conv_ln_g", "conv_ln_b", "pwa_b", "pwb_b", "dw_b",
    "bn_scale", "bn_bias", "pw2_b",
    "ffn2_ln_g", "ffn2_ln_b", "ffn2_b2",
    "fin_ln_g", "fin_ln_b",
)
VROW = {n: i for i, n in enumerate(VEC_D_NAMES)}


# ----------------------------- fused multi-layer conformer kernel ------------------------------

def _conformer_layers_kernel(n_heads, kernel_size,
                             x_ref, mask_ref, vecd_ref, vecf_ref, bqkv_ref,
                             ffn1_w1_ref, ffn1_w2_ref,
                             wq_ref, wk_ref, wv_ref, wo_ref,
                             pwa_ref, pwb_ref, dw_ref, pw2_ref,
                             ffn2_w1_ref, ffn2_w2_ref,
                             o_ref, acc_ref):
    l = pl.program_id(1)
    n_layers = pl.num_programs(1)

    # Load the activation into the resident VMEM carry at the first layer of this batch element.
    @pl.when(l == 0)
    def _():
        acc_ref[...] = x_ref[0].astype(jnp.float32)

    x = acc_ref[...]                                     # (T, D) f32, resident across layers
    T, D = x.shape
    H = n_heads
    dh = D // H
    K = kernel_size
    pad = (K - 1) // 2

    mask_add = mask_ref[0].astype(jnp.float32)           # (1, T) additive key-padding mask (f32)

    def vrow(name):                                      # (1, D) f32 packed vector row
        i = VROW[name]
        return vecd_ref[0, i:i + 1, :]

    def mm(a, w):                                        # bf16 matmul, f32 accumulation
        return jnp.dot(a.astype(w.dtype), w, preferred_element_type=jnp.float32)

    # ---------- FFN1 (half-step residual) ----------
    h = _layer_norm(x, vrow("ffn1_ln_g"), vrow("ffn1_ln_b"))
    h = _silu(mm(h, ffn1_w1_ref[0]) + vecf_ref[0, 0:1, :])
    h = mm(h, ffn1_w2_ref[0]) + vrow("ffn1_b2")
    x = x + 0.5 * h

    # ---------- Multi-head self-attention (per-head matmuls, f32 softmax) ----------
    h = _layer_norm(x, vrow("attn_ln_g"), vrow("attn_ln_b"))
    h_bf = h.astype(jnp.bfloat16)
    scale = 1.0 / math.sqrt(dh)
    attn_out = jnp.zeros((T, D), jnp.float32)
    for hh in range(H):
        q_h = mm(h_bf, wq_ref[0, hh]) + bqkv_ref[0, hh:hh + 1, :]                # (T, dh)
        k_h = mm(h_bf, wk_ref[0, hh]) + bqkv_ref[0, H + hh:H + hh + 1, :]        # (T, dh)
        v_h = mm(h_bf, wv_ref[0, hh]) + bqkv_ref[0, 2 * H + hh:2 * H + hh + 1, :]
        s = jax.lax.dot_general((q_h * scale).astype(jnp.bfloat16),
                                k_h.astype(jnp.bfloat16),
                                (((1,), (1,)), ((), ())),
                                preferred_element_type=jnp.float32)              # (T, T)
        s = s + mask_add                                                         # mask in f32
        s = s - jnp.max(s, axis=-1, keepdims=True)
        e = jnp.exp(s)
        p_attn = e * pl.reciprocal(jnp.sum(e, axis=-1, keepdims=True), approx=True)
        ctx_h = jnp.dot(p_attn.astype(jnp.bfloat16), v_h.astype(jnp.bfloat16),
                        preferred_element_type=jnp.float32)                      # (T, dh)
        attn_out = attn_out + mm(ctx_h, wo_ref[0, hh])                           # (T, D)
    x = x + attn_out + vrow("bo")

    # ---------- Convolution module ----------
    res = x
    h = _layer_norm(x, vrow("conv_ln_g"), vrow("conv_ln_b"))
    a = mm(h, pwa_ref[0]) + vrow("pwa_b")
    g = mm(h, pwb_ref[0]) + vrow("pwb_b")
    h = a * jax.nn.sigmoid(g)                            # GLU over channels
    # Depthwise conv along time ("same" zero padding) via time rolls + boundary masks + FMA.
    t_idx = jax.lax.broadcasted_iota(jnp.int32, (T, 1), 0)     # hoisted once
    dw = jnp.zeros((T, D), jnp.float32)
    for kk in range(K):
        off = kk - pad
        if off == 0:
            shifted = h
        else:
            shifted = pltpu.roll(h, (-off) % T, axis=0)         # out[t] = h[t + off]
            valid = jnp.logical_and(t_idx >= -off, t_idx < T - off)
            shifted = jnp.where(valid, shifted, 0.0)
        dw = dw + shifted * dw_ref[0, kk:kk + 1, :]
    dw = dw + vrow("dw_b")
    # Eval-mode BatchNorm1d folded to scale/bias (running_mean=0, running_var=1).
    # TODO(synk): training-mode batch statistics (over batch*time) are not reproduced here.
    dw = dw * vrow("bn_scale") + vrow("bn_bias")
    dw = _silu(dw)
    x = res + mm(dw, pw2_ref[0]) + vrow("pw2_b")

    # ---------- FFN2 (half-step residual) ----------
    h = _layer_norm(x, vrow("ffn2_ln_g"), vrow("ffn2_ln_b"))
    h = _silu(mm(h, ffn2_w1_ref[0]) + vecf_ref[0, 1:2, :])
    h = mm(h, ffn2_w2_ref[0]) + vrow("ffn2_b2")
    x = x + 0.5 * h

    # ---------- Final layer norm ----------
    x = _layer_norm(x, vrow("fin_ln_g"), vrow("fin_ln_b"))

    acc_ref[...] = x                                      # carry to the next layer

    @pl.when(l == n_layers - 1)
    def _():
        o_ref[0] = x.astype(o_ref.dtype)


def conformer_layers(x, mask_add, sp, n_heads, kernel_size):
    # x: (B, T, D) f32, mask_add: (B, 1, T) f32, sp: stacked/packed per-layer params.
    B, T, D = x.shape
    assert D % n_heads == 0
    H = n_heads
    dh = D // H
    L, NVD, _ = sp["vecs_d"].shape
    F = sp["ffn1_w1"].shape[2]
    K = sp["dw_w"].shape[1]

    kernel = functools.partial(_conformer_layers_kernel, n_heads, kernel_size)

    bmap = lambda b, l: (b, 0, 0)          # batch-indexed blocks (constant across layers)
    lmap3 = lambda b, l: (l, 0, 0)         # layer-indexed 3D weight blocks
    lmap4 = lambda b, l: (l, 0, 0, 0)      # layer-indexed 4D (per-head) weight blocks

    in_specs = [
        pl.BlockSpec((1, T, D), bmap),          # x
        pl.BlockSpec((1, 1, T), bmap),          # additive key-padding mask
        pl.BlockSpec((1, NVD, D), lmap3),       # packed (1,D)-wide vectors
        pl.BlockSpec((1, 2, F), lmap3),         # packed (1,F)-wide vectors
        pl.BlockSpec((1, 3 * H, dh), lmap3),    # per-head q/k/v biases
        pl.BlockSpec((1, D, F), lmap3),         # ffn1_w1
        pl.BlockSpec((1, F, D), lmap3),         # ffn1_w2
        pl.BlockSpec((1, H, D, dh), lmap4),     # wq (per head)
        pl.BlockSpec((1, H, D, dh), lmap4),     # wk (per head)
        pl.BlockSpec((1, H, D, dh), lmap4),     # wv (per head)
        pl.BlockSpec((1, H, dh, D), lmap4),     # wo (per head)
        pl.BlockSpec((1, D, D), lmap3),         # pointwise conv 1 (a half)
        pl.BlockSpec((1, D, D), lmap3),         # pointwise conv 1 (gate half)
        pl.BlockSpec((1, K, D), lmap3),         # depthwise conv weight
        pl.BlockSpec((1, D, D), lmap3),         # pointwise conv 2
        pl.BlockSpec((1, D, F), lmap3),         # ffn2_w1
        pl.BlockSpec((1, F, D), lmap3),         # ffn2_w2
    ]

    return pl.pallas_call(
        kernel,
        out_shape=jax.ShapeDtypeStruct((B, T, D), x.dtype),
        grid=(B, L),
        in_specs=in_specs,
        out_specs=pl.BlockSpec((1, T, D), bmap),
        scratch_shapes=[pltpu.VMEM((T, D), jnp.float32)],   # resident activation carry
        compiler_params=pltpu.CompilerParams(
            dimension_semantics=("parallel", "arbitrary"),
            vmem_limit_bytes=64 * 1024 * 1024),
    )(x, mask_add,
      sp["vecs_d"], sp["vecs_f"], sp["bqkv"],
      sp["ffn1_w1"], sp["ffn1_w2"],
      sp["wq_h"], sp["wk_h"], sp["wv_h"], sp["wo_h"],
      sp["pwa_w"], sp["pwb_w"], sp["dw_w"], sp["pw2_w"],
      sp["ffn2_w1"], sp["ffn2_w2"])


# ----------------------------- subsampling + full encoder (glue in plain JAX) -------------------

def stacking_subsampling(features_btf, lengths, w, b, stride):
    # features_btf: (B, T, F); stacks `stride` consecutive frames then projects to d_model.
    B, T, F = features_btf.shape
    pad_size = (stride - (T % stride)) % stride
    if pad_size:
        features_btf = jnp.pad(features_btf, ((0, 0), (0, pad_size), (0, 0)))
    Tp = T + pad_size
    flat = features_btf.reshape(B * (Tp // stride), stride * F)
    out = linear(flat, w, b).reshape(B, Tp // stride, w.shape[1])
    out_len = (lengths + pad_size) // stride
    return out, out_len


def conformer_encoder(features, lengths, params, *, stride, n_heads, kernel_size):
    # features: (B, F, T) like the PyTorch module input; lengths: (B,) int32
    x = jnp.transpose(features, (0, 2, 1))                       # (B, T, F)
    x, enc_len = stacking_subsampling(x, lengths, params["sub_w"], params["sub_b"], stride)
    B, T, D = x.shape
    t_idx = jnp.arange(T)[None, :]
    pad_mask = t_idx >= enc_len[:, None]                         # True = padding
    mask_add = jnp.where(pad_mask, -1e9, 0.0).astype(jnp.float32)[:, None, :]   # (B, 1, T)
    x = conformer_layers(x, mask_add, params["stacked"], n_heads, kernel_size)
    return x, enc_len


# ----------------------------- parameter init + packing -----------------------------------------

def init_layer_params(key, D, F_ff, K):
    keys = jax.random.split(key, 12)

    def w(k, shape, scale=0.02):
        return (scale * jax.random.normal(k, shape)).astype(jnp.float32)

    ones = lambda n: jnp.ones((1, n), jnp.float32)
    zeros = lambda n: jnp.zeros((1, n), jnp.float32)
    return {
        "ffn1_ln_g": ones(D), "ffn1_ln_b": zeros(D),
        "ffn1_w1": w(keys[0], (D, F_ff)), "ffn1_b1": zeros(F_ff),
        "ffn1_w2": w(keys[1], (F_ff, D)), "ffn1_b2": zeros(D),
        "attn_ln_g": ones(D), "attn_ln_b": zeros(D),
        "wq": w(keys[2], (D, D)), "bq": zeros(D),
        "wk": w(keys[3], (D, D)), "bk": zeros(D),
        "wv": w(keys[4], (D, D)), "bv": zeros(D),
        "wo": w(keys[5], (D, D)), "bo": zeros(D),
        "conv_ln_g": ones(D), "conv_ln_b": zeros(D),
        "pwa_w": w(keys[6], (D, D)), "pwa_b": zeros(D),
        "pwb_w": w(keys[7], (D, D)), "pwb_b": zeros(D),
        # TODO(synk): PyTorch Conv1d depthwise weight layout is (D, 1, K); transpose when importing.
        "dw_w": w(keys[8], (K, D)), "dw_b": zeros(D),
        "bn_g": ones(D), "bn_b": zeros(D),
        "pw2_w": w(keys[9], (D, D)), "pw2_b": zeros(D),
        "ffn2_ln_g": ones(D), "ffn2_ln_b": zeros(D),
        "ffn2_w1": w(keys[10], (D, F_ff)), "ffn2_b1": zeros(F_ff),
        "ffn2_w2": w(keys[11], (F_ff, D)), "ffn2_b2": zeros(D),
        "fin_ln_g": ones(D), "fin_ln_b": zeros(D),
    }


def pack_layer_params(layer_params, n_heads, bn_eps=1e-5):
    # Stack per-layer params with a leading layer axis; pre-split attention weights per head;
    # pack small (1, D)/(1, F) vectors into a few operands; cast matmul weights to bf16.
    D = layer_params[0]["wq"].shape[0]
    assert D % n_heads == 0
    dh = D // n_heads
    bf16 = jnp.bfloat16

    def per_layer_dvecs(p):
        rows = dict(p)
        rows["bn_scale"] = p["bn_g"] / jnp.sqrt(1.0 + bn_eps)    # running_var = 1
        rows["bn_bias"] = p["bn_b"]                              # running_mean = 0
        return jnp.concatenate([rows[n] for n in VEC_D_NAMES], axis=0)   # (NVD, D)

    def stk(fn, dtype=None):
        a = jnp.stack([fn(p) for p in layer_params], axis=0)
        return a.astype(dtype) if dtype is not None else a

    split_cols = lambda w: w.reshape(D, n_heads, dh).transpose(1, 0, 2)   # (H, D, dh)

    return {
        "vecs_d": stk(per_layer_dvecs),                                                   # f32
        "vecs_f": stk(lambda p: jnp.concatenate([p["ffn1_b1"], p["ffn2_b1"]], axis=0)),   # f32
        "bqkv": stk(lambda p: jnp.concatenate(
            [p["bq"].reshape(n_heads, dh),
             p["bk"].reshape(n_heads, dh),
             p["bv"].reshape(n_heads, dh)], axis=0)),                                     # f32
        "ffn1_w1": stk(lambda p: p["ffn1_w1"], bf16),
        "ffn1_w2": stk(lambda p: p["ffn1_w2"], bf16),
        "wq_h": stk(lambda p: split_cols(p["wq"]), bf16),
        "wk_h": stk(lambda p: split_cols(p["wk"]), bf16),
        "wv_h": stk(lambda p: split_cols(p["wv"]), bf16),
        "wo_h": stk(lambda p: p["wo"].reshape(n_heads, dh, D), bf16),
        "pwa_w": stk(lambda p: p["pwa_w"], bf16),
        "pwb_w": stk(lambda p: p["pwb_w"], bf16),
        "dw_w": stk(lambda p: p["dw_w"]),           # f32 (VPU path)
        "pw2_w": stk(lambda p: p["pw2_w"], bf16),
        "ffn2_w1": stk(lambda p: p["ffn2_w1"], bf16),
        "ffn2_w2": stk(lambda p: p["ffn2_w2"], bf16),
    }


if __name__ == "__main__":
    # Small, shape-consistent config:
    B, F, T = 2, 8, 16                 # batch, mel features, time frames
    stride = 2                         # subsampling_stride
    D = 32                             # d_model
    n_layers = 2
    n_heads = 4
    ff_exp = 2                         # ff_exp_factor -> ffn_dim = 64
    K = 7                              # depthwise_conv_kernel_size (odd)

    key = jax.random.PRNGKey(0)
    k_feat, k_sub, *k_layers = jax.random.split(key, 2 + n_layers)

    features = jax.random.normal(k_feat, (B, F, T), jnp.float32)      # (B, F, T)
    features_length = jnp.array([16, 12], jnp.int32)

    layer_params = [init_layer_params(k, D, D * ff_exp, K) for k in k_layers]
    params = {
        "sub_w": (0.02 * jax.random.normal(k_sub, (stride * F, D))).astype(jnp.float32),
        "sub_b": jnp.zeros((1, D), jnp.float32),
        "stacked": pack_layer_params(layer_params, n_heads),
    }

    encoded, encoded_len = conformer_encoder(
        features, features_length, params,
        stride=stride, n_heads=n_heads, kernel_size=K)
    jax.block_until_ready((encoded, encoded_len))

    assert encoded.shape == (B, T // stride, D)
    assert encoded_len.shape == (B,)
    print("KERNEL_OK")
</pallas_src>

<mosaic_0001>
module attributes {stable_mosaic.version = 11 : i64} {
  func.func @_linear_kernel(%arg0: i32, %arg1: memref<16x16xf32, #tpu.memory_space<vmem>>, %arg2: memref<16x32xf32, #tpu.memory_space<vmem>>, %arg3: memref<1x32xf32, #tpu.memory_space<vmem>>, %arg4: memref<16x32xf32, #tpu.memory_space<vmem>>) attributes {dimension_semantics = [#tpu.dimension_semantics<parallel>], iteration_bounds = array<i64: 1>, scalar_prefetch = 0 : i64, scratch_operands = 0 : i64, tpu.core_type = #tpu.core_type<tc>, window_params = [{transform_indices = @transform_0, window_bounds = array<i64: 16, 16>}, {pipeline_mode = #tpu.pipeline_mode<synchronous>, transform_indices = @transform_1, window_bounds = array<i64: 16, 32>}, {pipeline_mode = #tpu.pipeline_mode<synchronous>, transform_indices = @transform_2, window_bounds = array<i64: 1, 32>}, {transform_indices = @transform_3, window_bounds = array<i64: 16, 32>}]} {
    %c0 = arith.constant 0 : index
    %c0_0 = arith.constant 0 : index
    %0 = vector.load %arg1[%c0, %c0_0] : memref<16x16xf32, #tpu.memory_space<vmem>>, vector<16x16xf32>
    %c0_1 = arith.constant 0 : index
    %c0_2 = arith.constant 0 : index
    %1 = vector.load %arg2[%c0_1, %c0_2] : memref<16x32xf32, #tpu.memory_space<vmem>>, vector<16x32xf32>
    %cst = arith.constant dense<0.000000e+00> : vector<16x32xf32>
    %2 = tpu.matmul %0, %1, %cst {dimension_numbers = #tpu.dot_dimension_numbers<[1], [0], [0], [1], [0, 0, 1, 1], [], []>} : vector<16x16xf32>, vector<16x32xf32>, vector<16x32xf32> -> vector<16x32xf32>
    %c0_3 = arith.constant 0 : index
    %c0_4 = arith.constant 0 : index
    %3 = vector.load %arg3[%c0_3, %c0_4] : memref<1x32xf32, #tpu.memory_space<vmem>>, vector<1x32xf32>
    %4 = vector.broadcast %3 : vector<1x32xf32> to vector<16x32xf32>
    %5 = arith.addf %2, %4 : vector<16x32xf32>
    %c0_5 = arith.constant 0 : index
    %c0_6 = arith.constant 0 : index
    %6 = vector.load %arg4[%c0_5, %c0_6] : memref<16x32xf32, #tpu.memory_space<vmem>>, vector<16x32xf32>
    tpu.vector_store %arg4[%c0_5, %c0_6], %5 {strides = array<i32>} : memref<16x32xf32, #tpu.memory_space<vmem>>, vector<16x32xf32>,
    return
  }
  func.func @transform_0(%arg0: i32) -> (i32, i32) {
    %c0_i32 = arith.constant 0 : i32
    %c0_i32_0 = arith.constant 0 : i32
    return %arg0, %c0_i32 : i32, i32
  }
  func.func @transform_1(%arg0: i32) -> (i32, i32) {
    %c0_i32 = arith.constant 0 : i32
    %c0_i32_0 = arith.constant 0 : i32
    %c0_i32_1 = arith.constant 0 : i32
    return %c0_i32, %c0_i32_0 : i32, i32
  }
  func.func @transform_2(%arg0: i32) -> (i32, i32) {
    %c0_i32 = arith.constant 0 : i32
    %c0_i32_0 = arith.constant 0 : i32
    %c0_i32_1 = arith.constant 0 : i32
    return %c0_i32, %c0_i32_0 : i32, i32
  }
  func.func @transform_3(%arg0: i32) -> (i32, i32) {
    %c0_i32 = arith.constant 0 : i32
    %c0_i32_0 = arith.constant 0 : i32
    return %arg0, %c0_i32 : i32, i32
  }
}

</mosaic_0001>

<llo_original>
// kernel: tpu_custom_call.1
$region0: #{tpu_custom_call.1}
  #allocation0 [shape = 'u32[]', space=smem, size = 0x4, offset = 0x4, fixed_abs, tag = 'smem constant byte address 0x4 - core index']
  #allocation1 [shape = 'u32[144,128]{1,0:T(1,128)}', space=vmem, size = 0x12000, scoped, tag = 'internal scratch']
  %s0 = inlined_call_operand.hbm [shape: f32[16,16], index: 0, kind: input, shape index: {}]
  %s1 = inlined_call_operand.hbm [shape: f32[16,32], index: 1, kind: input, shape index: {}]
  %s2 = inlined_call_operand.vmem [shape: f32[1,32], index: 2, kind: input, shape index: {}]
  %s3 = inlined_call_operand.hbm [shape: f32[16,32], index: 3, kind: output, shape index: {}]
  %s4 = sld [smem:[#allocation0]]
  $region30: #{tpu_custom_call.1} parent=0
    _
  %s6 = ssub.s32 1, %s4
  %s7 = scalar_select 0, %s6, %s4
  $region1: #{tpu_custom_call.1} parent=0
    #allocation2 [shape = 'u8[8192]{0}', space=vmem, size = 0x2000, scoped, tag = 'input window, operand 0, single buffered']
    #allocation3 [shape = 's32[1]{0}', space=sflag, size = 0x4, scoped, tag = 'scoped memory for tpu_custom_call.1']
    #allocation4 [shape = 's32[1]{0}', space=sflag, size = 0x4, scoped, tag = 'scoped memory for tpu_custom_call.1']
    #allocation5 [shape = 'u8[8192]{0}', space=vmem, size = 0x2000, scoped, tag = 'input window, operand 1, single buffered']
    #allocation6 [shape = 's32[1]{0}', space=sflag, size = 0x4, scoped, tag = 'scoped memory for tpu_custom_call.1']
    #allocation7 [shape = 'u8[8192]{0}', space=vmem, size = 0x2000, scoped, tag = 'output window, operand 0, single buffered']
    %8 = vsyncpa [#allocation3], 0
    %9 = vsyncpa [#allocation6], 0
    %10 = vsyncpa [#allocation4], 0
    // Predicated region
    $region2: #{tpu_custom_call.1} parent=1 // pred_check
      _
    $region3: #{tpu_custom_call.1} parent=1 // pred_check_branch
      %12 = sbr.rel (0) target = $region5
    $region4: #{tpu_custom_call.1} parent=1 // pred_region
      %s14 = ssub.s32 256, 256
      %15 = vsyncadd [#allocation3], %s14
      %s16 = sshll.u32 [#allocation2], 4
      %s17 = int_to_ptr.vmem [resolvable:$true] %s16
      %22 = dma.hbm_to_vmem [thread:$0]  %s0, 256, %s17, [#allocation3], 128, 128, 8
    $region5: #{tpu_custom_call.1} parent=1 // pred_fallthru
      _
    // Predicated region
    $region6: #{tpu_custom_call.1} parent=1 // pred_check
      _
    $region7: #{tpu_custom_call.1} parent=1 // pred_check_branch
      %24 = sbr.rel (0) target = $region9
    $region8: #{tpu_custom_call.1} parent=1 // pred_region
      %s26 = ssub.s32 256, 256
      %27 = vsyncadd [#allocation6], %s26
      %s28 = sshll.u32 [#allocation5], 4
      %s29 = int_to_ptr.vmem [resolvable:$true] %s28
      %34 = dma.hbm_to_vmem [thread:$0]  %s1, 256, %s29, [#allocation6], 128, 128, 8
    $region9: #{tpu_custom_call.1} parent=1 // pred_fallthru
      _
    // Predicated region
    $region10: #{tpu_custom_call.1} parent=1 // pred_check
      _
    $region11: #{tpu_custom_call.1} parent=1 // pred_check_branch
      %36 = sbr.rel (0) target = $region13
    $region12: #{tpu_custom_call.1} parent=1 // pred_region
      _
    $region13: #{tpu_custom_call.1} parent=1 // pred_fallthru
      _
    // Predicated region
    $region14: #{tpu_custom_call.1} parent=1 // pred_check
      _
    $region15: #{tpu_custom_call.1} parent=1 // pred_check_branch
      %38 = sbr.rel (0) target = $region17
    $region16: #{tpu_custom_call.1} parent=1 // pred_region
      %39 = dma.done [#allocation3], 256
    $region17: #{tpu_custom_call.1} parent=1 // pred_fallthru
      _
    // Predicated region
    $region18: #{tpu_custom_call.1} parent=1 // pred_check
      _
    $region19: #{tpu_custom_call.1} parent=1 // pred_check_branch
      %41 = sbr.rel (0) target = $region21
    $region20: #{tpu_custom_call.1} parent=1 // pred_region
      %42 = dma.done [#allocation6], 256
    $region21: #{tpu_custom_call.1} parent=1 // pred_fallthru
      _
    %v43 = vld [vmem:[#allocation2] sm:$0xff]
    %v44 = vld [vmem:[#allocation2 + $0x8] sm:$0xff]
    %v45 = vld [vmem:[#allocation5] sm:$0xff]
    %v46 = vld [vmem:[#allocation5 + $0x8] sm:$0xff]
    %v47 = vld [vmem:[%s2] sm:$0x1]
    %v49 = vlaneseq
    %v50 = vshrl.u32 %v49, 7
    %v51 = vsub.s32 0, %v50
    %v52 = vrot.slane %v47, %v51
    %vm54 = vcmask 130048
    %v56 = vsel %vm54, %v43, 0
    %v59 = vsel %vm54, %v44, 0
    %61 = vmatprep.subr.mxu0 0.0
    %62 = vmatpush1.msra.mxu0 0.0
    %63 = vmatprep.subr.mxu0 0.0
    %64 = vmatpush1.msra.mxu0 0.0
    %65 = vmatprep.subr.mxu0 0.0
    %66 = vmatpush1.msra.mxu0 0.0
    %67 = vmatprep.subr.mxu0 0.0
    %68 = vmatpush1.msra.mxu0 0.0
    %69 = vmatprep.subr.mxu0 0.0
    %70 = vmatpush1.msra.mxu0 0.0
    %71 = vmatprep.subr.mxu0 0.0
    %72 = vmatpush1.msra.mxu0 0.0
    %73 = vmatprep.subr.mxu0 0.0
    %74 = vmatpush1.msra.mxu0 0.0
    %75 = vmatprep.subr.mxu0 0.0
    %76 = vmatpush1.msra.mxu0 0.0
    %77 = vmatprep.subr.mxu0 0.0
    %78 = vmatpush1.msra.mxu0 0.0
    %79 = vmatprep.subr.mxu0 0.0
    %80 = vmatpush1.msra.mxu0 0.0
    %81 = vmatprep.subr.mxu0 0.0
    %82 = vmatpush1.msra.mxu0 0.0
    %83 = vmatprep.subr.mxu0 0.0
    %84 = vmatpush1.msra.mxu0 0.0
    %85 = vmatprep.subr.mxu0 0.0
    %86 = vmatpush1.msra.mxu0 0.0
    %87 = vmatprep.subr.mxu0 0.0
    %88 = vmatpush1.msra.mxu0 0.0
    %89 = vmatprep.subr.mxu0 0.0
    %90 = vmatpush1.msra.mxu0 %v46
    %91 = vmatprep.subr.mxu0 0.0
    %92 = vmatpush1.msra.mxu0 %v45
    %93 = vmatprep.subr.mxu0 0.0
    %94 = vmatpush2.msra.mxu0 0.0
    %95 = vmatprep.subr.mxu0 0.0
    %96 = vmatpush2.msra.mxu0 0.0
    %97 = vmatprep.subr.mxu0 0.0
    %98 = vmatpush2.msra.mxu0 0.0
    %99 = vmatprep.subr.mxu0 0.0
    %100 = vmatpush2.msra.mxu0 0.0
    %101 = vmatprep.subr.mxu0 0.0
    %102 = vmatpush2.msra.mxu0 0.0
    %103 = vmatprep.subr.mxu0 0.0
    %104 = vmatpush2.msra.mxu0 0.0
    %105 = vmatprep.subr.mxu0 0.0
    %106 = vmatpush2.msra.mxu0 0.0
    %107 = vmatprep.subr.mxu0 0.0
    %108 = vmatpush2.msra.mxu0 0.0
    %109 = vmatprep.subr.mxu0 0.0
    %110 = vmatpush2.msra.mxu0 0.0
    %111 = vmatprep.subr.mxu0 0.0
    %112 = vmatpush2.msra.mxu0 0.0
    %113 = vmatprep.subr.mxu0 0.0
    %114 = vmatpush2.msra.mxu0 0.0
    %115 = vmatprep.subr.mxu0 0.0
    %116 = vmatpush2.msra.mxu0 0.0
    %117 = vmatprep.subr.mxu0 0.0
    %118 = vmatpush2.msra.mxu0 0.0
    %119 = vmatprep.subr.mxu0 0.0
    %120 = vmatpush2.msra.mxu0 0.0
    %121 = vmatprep.subr.mxu0 0.0
    %122 = vmatpush2.msra.mxu0 0.0
    %123 = vmatprep.subr.mxu0 0.0
    %124 = vmatpush2.msra.mxu0 0.0
    %125 = vmatprep.mubr.f32.mxu0 0.0
    %126 = vmatmul.mubr.f32.gmra.mxu0 %v56
    %v127 = vpop.f32.mrf.mxu0
    %v128 = vadd.f32 %v52, %v127
    %v129 = vpop.f32.mrf.mxu0
    %130 = vmatprep.mubr.f32.mxu0 0.0
    %131 = vmatmul.mubr.f32.gmra.mxu0 %v59
    %v132 = vpop.f32.mrf.mxu0
    %v133 = vadd.f32 %v52, %v132
    %v134 = vpop.f32.mrf.mxu0
    %135 = vdwg.mxu0
    %vm136 = vcmask 261120
    %137 = vst.msk [vmem:[#allocation7] sm:$0xff] %vm136, %v128
    %138 = vst.msk [vmem:[#allocation7 + $0x8] sm:$0xff] %vm136, %v133
    // Predicated region
    $region22: #{tpu_custom_call.1} parent=1 // pred_check
      _
    $region23: #{tpu_custom_call.1} parent=1 // pred_check_branch
      %140 = sbr.rel (0) target = $region25
    $region24: #{tpu_custom_call.1} parent=1 // pred_region
      %s142 = ssub.s32 256, 256
      %143 = vsyncadd [#allocation4], %s142
      %s144 = sshll.u32 [#allocation7], 4
      %s145 = int_to_ptr.vmem [resolvable:$true] %s144
      %150 = dma.vmem_to_hbm [thread:$0]  %s145, 256, %s3, [#allocation4], 128, 128, 8
    $region25: #{tpu_custom_call.1} parent=1 // pred_fallthru
      _
    // Predicated region
    $region26: #{tpu_custom_call.1} parent=1 // pred_check
      _
    $region27: #{tpu_custom_call.1} parent=1 // pred_check_branch
      %152 = sbr.rel (0) target = $region29
    $region28: #{tpu_custom_call.1} parent=1 // pred_region
      %153 = dma.done [#allocation4], 256
    $region29: #{tpu_custom_call.1} parent=1 // pred_fallthru
      _
    %154 = vsyncpa [#allocation3], 1
    %155 = vsyncpa [#allocation6], 1
    %156 = vsyncpa [#allocation4], 1

</llo_original>
